<compile_context>
chip_gen: v7x
topology: tpu7x:2x2x1
jax: 0.10.0
libtpu: 0.0.40
codegen_flags: <defaults>
</compile_context>

<pallas_src>
import math

import numpy as np
import jax
import jax.numpy as jnp
from jax.experimental import pallas as pl
from jax.experimental.pallas import tpu as pltpu

# ----------------------------- config -----------------------------
EMB = 32                    # emb_size
DFF = 64                    # dff
NUM_HEADS = 4               # num_heads -> head_dim = 8
HEAD_DIM = EMB // NUM_HEADS
CTX = 8                     # context_length == T
BATCH = 2
N_TOK = BATCH * CTX         # 16 flattened token rows
NC = NUM_HEADS * N_TOK      # 64 score columns (head-major blocks of N_TOK)
LANE = 128
LN_EPS = 1e-5
NEG_BIG = -1e30             # finite "minus infinity"


def _layernorm(z, gamma, beta):
    mu = jnp.mean(z, axis=-1, keepdims=True)
    var = jnp.mean((z - mu) ** 2, axis=-1, keepdims=True)
    return (z - mu) * jax.lax.rsqrt(var + LN_EPS) * gamma + beta


def decoder_kernel(x_ref, ws_ref, nw_ref, msk_ref, cb_ref, o_ref):
    E, H, N, C = EMB, NUM_HEADS, N_TOK, NC

    x = x_ref[...]                                 # (16, 32)

    # ---- weights / constants (all ref slices are 128-lane / 8-sublane aligned) ----
    wqkv = ws_ref[:, 0:LANE]                       # (32,128) [Wq*scale | Wk | Wv | 0]
    w1p = ws_ref[:, LANE:2 * LANE]                 # (32,128) [W1 | 0]
    wop = nw_ref[0]                                # (128,32) Wo at rows 32..63, 0 else
    w2p = nw_ref[1]                                # (128,32) W2 at rows 0..63, 0 else
    mk = msk_ref[0:C, :]                           # (64,128) head sel @ lanes 0..31
    mv = msk_ref[C:2 * C, :]                       # (64,128) head sel @ lanes 32..63
    sbias = cb_ref[0:N, 0:C]                       # (16,64)  0 (valid) / -1e30 (masked)
    vecs = cb_ref[N:N + 8, :]                      # (8,128)  packed bias / LN vectors
    bo, g1, be1 = vecs[0:1, :E], vecs[1:2, :E], vecs[2:3, :E]
    bf1 = vecs[3:4, :]                             # (1,128), exactly 0 beyond DFF
    bf2, g2, be2 = vecs[4:5, :E], vecs[5:6, :E], vecs[6:7, :E]

    # ---- push 1: fused q|k|v projection (1/sqrt(hd) already folded into Wq) ----
    qkv = jnp.dot(x, wqkv, preferred_element_type=jnp.float32)       # (16,128)

    # bring k to lanes 0..31 and v to lanes 32..63 (one XLU lane rotate), then
    # replicate per head and mask with trace-time constants.
    kv = pltpu.roll(qkv, shift=96, axis=1)                           # k | v | 0 | q
    kv_rep = jnp.concatenate([kv] * H, axis=0)                       # (64,128)
    kbig = kv_rep * mk                  # block-diagonal K (lanes 0..31 only)
    vaug = kv_rep * mv + mk             # block-diag V @ lanes 32..63 + denom ones @ 0..31

    # ---- push 2: scores; causal/same-batch mask is a precomputed additive bias ----
    s = jax.lax.dot_general(qkv, kbig, (((1,), (1,)), ((), ())),
                            preferred_element_type=jnp.float32) + sbias   # (16,64)

    # Softmax numerator with a row-global max (exact per head segment since the
    # constant cancels).  NOTE: if one head's max exceeds another's by >~88 the weak
    # head underflows to ~0 (clamp below keeps it NaN-free); fine for normal scales.
    m = jnp.max(s, axis=-1, keepdims=True)
    p = jnp.exp(s - m)                                               # (16,64)

    # ---- push 3: ONE matmul yields per-head denominators (lanes 0..31, repeated x8)
    #      and unnormalised head outputs (lanes 32..63) ----
    acc = jnp.dot(p, vaug, preferred_element_type=jnp.float32)       # (16,128)
    rec = pl.reciprocal(jnp.maximum(acc, 1e-30), approx=False)       # EUP slot, NaN-safe
    attn = acc * pltpu.roll(rec, shift=32, axis=1)   # lanes 32..63 = softmax(.) @ V

    # ---- push 4: output projection; rows of wop outside 32..63 are zero, so the
    #      junk lanes of `attn` contribute exactly nothing ----
    attn = jnp.dot(attn, wop, preferred_element_type=jnp.float32) + bo    # (16,32)

    # ---- residual 1 ----
    out = jnp.maximum(_layernorm(attn, g1, be1) + x, 0.0)

    # ---- pushes 5/6: FFN.  Hidden padded to 128 lanes; padding stays exactly zero
    #      because bf1's pad lanes are 0 (relu(0)=0) and W2's pad rows are 0. ----
    h1 = jnp.maximum(jnp.dot(out, w1p, preferred_element_type=jnp.float32) + bf1, 0.0)
    h2 = jnp.dot(h1, w2p, preferred_element_type=jnp.float32) + bf2

    # ---- residual 2 ----
    # TODO(synk): lane-dense (4,128) store skipped -- relayout > masked-store cost here.
    o_ref[...] = jnp.maximum(_layernorm(h2, g2, be2) + out, 0.0).astype(o_ref.dtype)


# ----------------------------- host-side packing (done once) -----------------------------
def pack_decoder_params(params):
    (wq, wk, wv, wo, bo, g1, be1, w1, bf1, w2, bf2, g2, be2) = params
    E, H, hd, N, C, T = EMB, NUM_HEADS, HEAD_DIM, N_TOK, NC, CTX
    scale = 1.0 / math.sqrt(hd)

    # weight slab (E, 256): [Wq*scale | Wk | Wv | 0] (lanes 0..127) | [W1 | 0] (128..255)
    ws = np.zeros((E, 2 * LANE), np.float32)
    ws[:, 0:E] = np.asarray(wq) * scale
    ws[:, E:2 * E] = np.asarray(wk)
    ws[:, 2 * E:3 * E] = np.asarray(wv)
    ws[:, LANE:LANE + DFF] = np.asarray(w1)

    # contraction-side slab (2,128,32): [0]=Wo placed at rows 32..63, [1]=W2 at rows 0..63
    nw = np.zeros((2, LANE, E), np.float32)
    nw[0, E:2 * E, :] = np.asarray(wo)
    nw[1, 0:DFF, :] = np.asarray(w2)

    # mask slab (128,128): rows 0..63 = MK (head selector @ lanes 0..31, doubles as the
    # denominator-ones block), rows 64..127 = MV (head selector @ lanes 32..63).
    col = np.arange(C)
    head = col // N
    lane = np.arange(LANE)
    mk = (lane[None, :] < E) & ((lane[None, :] // hd) == head[:, None])
    mv = ((lane[None, :] >= E) & (lane[None, :] < 2 * E)
          & (((lane[None, :] - E) // hd) == head[:, None]))
    msk = np.zeros((2 * C, LANE), np.float32)
    msk[0:C] = mk.astype(np.float32)
    msk[C:2 * C] = mv.astype(np.float32)

    # const/bias slab (24,128): rows 0..15 = additive score bias, rows 16..22 = vectors.
    row = np.arange(N)
    rb, rt = row // T, row % T
    cb_b, cb_s = (col % N) // T, (col % N) % T
    valid = (rb[:, None] == cb_b[None, :]) & (rt[:, None] >= cb_s[None, :])
    cb = np.zeros((N + 8, LANE), np.float32)
    cb[0:N, 0:C] = np.where(valid, 0.0, NEG_BIG).astype(np.float32)
    cb[N + 0, :E] = np.asarray(bo)[0]
    cb[N + 1, :E] = np.asarray(g1)[0]
    cb[N + 2, :E] = np.asarray(be1)[0]
    cb[N + 3, :DFF] = np.asarray(bf1)[0]   # pad lanes MUST stay 0 (FFN pad correctness)
    cb[N + 4, :E] = np.asarray(bf2)[0]
    cb[N + 5, :E] = np.asarray(g2)[0]
    cb[N + 6, :E] = np.asarray(be2)[0]

    return (jnp.asarray(ws), jnp.asarray(nw), jnp.asarray(msk), jnp.asarray(cb))


def decoder_forward(x, packed):
    ws, nw, msk, cb = packed
    B, T, E = x.shape
    x2d = x.reshape(B * T, E)
    out2d = pl.pallas_call(
        decoder_kernel,
        out_shape=jax.ShapeDtypeStruct((B * T, E), x.dtype),
        in_specs=[pl.BlockSpec(memory_space=pltpu.MemorySpace.VMEM)] * 5,
        out_specs=pl.BlockSpec(memory_space=pltpu.MemorySpace.VMEM),
    )(x2d, ws, nw, msk, cb)
    return out2d.reshape(B, T, E)


# ----------------------------- reference (plain JAX) -----------------------------
def decoder_ref(x, params):
    (wq, wk, wv, wo, bo, g1, be1, w1, bf1, w2, bf2, g2, be2) = params
    B, T, E = x.shape
    hd = E // NUM_HEADS
    q, k, v = x @ wq, x @ wk, x @ wv
    causal = jnp.tril(jnp.ones((T, T), bool))
    outs = []
    for h in range(NUM_HEADS):
        qh, kh, vh = (a[..., h * hd:(h + 1) * hd] for a in (q, k, v))
        att = jnp.einsum("btd,bsd->bts", qh, kh) / math.sqrt(hd)
        att = jnp.where(causal, att, -jnp.inf)
        att = jax.nn.softmax(att, axis=-1)
        outs.append(jnp.einsum("bts,bsd->btd", att, vh))
    attn = jnp.concatenate(outs, axis=-1) @ wo + bo

    def ln(z, g, b):
        mu = jnp.mean(z, -1, keepdims=True)
        var = jnp.mean((z - mu) ** 2, -1, keepdims=True)
        return (z - mu) / jnp.sqrt(var + LN_EPS) * g + b

    out = jax.nn.relu(ln(attn, g1, be1) + x)
    h = jax.nn.relu(out @ w1 + bf1)
    h = h @ w2 + bf2
    return jax.nn.relu(ln(h, g2, be2) + out)


def init_params(key):
    ks = jax.random.split(key, 16)
    s = 0.05
    wq = jax.random.normal(ks[0], (EMB, EMB), jnp.float32) * s
    wk = jax.random.normal(ks[1], (EMB, EMB), jnp.float32) * s
    wv = jax.random.normal(ks[2], (EMB, EMB), jnp.float32) * s
    wo = jax.random.normal(ks[3], (EMB, EMB), jnp.float32) * s
    bo = jax.random.normal(ks[4], (1, EMB), jnp.float32) * s
    g1 = jnp.ones((1, EMB), jnp.float32)
    be1 = jnp.zeros((1, EMB), jnp.float32)
    w1 = jax.random.normal(ks[5], (EMB, DFF), jnp.float32) * s
    bf1 = jax.random.normal(ks[6], (1, DFF), jnp.float32) * s
    w2 = jax.random.normal(ks[7], (DFF, EMB), jnp.float32) * s
    bf2 = jax.random.normal(ks[8], (1, EMB), jnp.float32) * s
    g2 = jnp.ones((1, EMB), jnp.float32)
    be2 = jnp.zeros((1, EMB), jnp.float32)
    return (wq, wk, wv, wo, bo, g1, be1, w1, bf1, w2, bf2, g2, be2)


if __name__ == "__main__":
    key = jax.random.PRNGKey(0)
    kx, kp = jax.random.split(key)
    x = jax.random.normal(kx, (BATCH, CTX, EMB), jnp.float32)
    params = init_params(kp)

    packed = pack_decoder_params(params)          # packed once, reused across calls
    out = decoder_forward(x, packed)
    out = jax.block_until_ready(out)

    ref = decoder_ref(x, params)
    assert out.shape == (BATCH, CTX, EMB)
    err = float(jnp.max(jnp.abs(out - ref)))
    assert jnp.allclose(out, ref, atol=5e-5, rtol=5e-5), err
    print("KERNEL_OK")
</pallas_src>

<mosaic_0001>
module attributes {stable_mosaic.version = 11 : i64} {
  func.func @decoder_kernel(%arg0: memref<16x32xf32, #tpu.memory_space<vmem>>, %arg1: memref<32x256xf32, #tpu.memory_space<vmem>>, %arg2: memref<2x128x32xf32, #tpu.memory_space<vmem>>, %arg3: memref<128x128xf32, #tpu.memory_space<vmem>>, %arg4: memref<24x128xf32, #tpu.memory_space<vmem>>, %arg5: memref<16x32xf32, #tpu.memory_space<vmem>>) attributes {dimension_semantics = [], scalar_prefetch = 0 : i64, scratch_operands = 0 : i64, tpu.core_type = #tpu.core_type<tc>} {
    %c0 = arith.constant 0 : index
    %c0_0 = arith.constant 0 : index
    %0 = vector.load %arg0[%c0, %c0_0] : memref<16x32xf32, #tpu.memory_space<vmem>>, vector<16x32xf32>
    %c0_1 = arith.constant 0 : index
    %c0_2 = arith.constant 0 : index
    %1 = vector.load %arg1[%c0_1, %c0_2] : memref<32x256xf32, #tpu.memory_space<vmem>>, vector<32x128xf32>
    %c0_3 = arith.constant 0 : index
    %c128 = arith.constant 128 : index
    %2 = vector.load %arg1[%c0_3, %c128] : memref<32x256xf32, #tpu.memory_space<vmem>>, vector<32x128xf32>
    %c0_4 = arith.constant 0 : index
    %c0_5 = arith.constant 0 : index
    %c0_6 = arith.constant 0 : index
    %3 = vector.load %arg2[%c0_4, %c0_5, %c0_6] : memref<2x128x32xf32, #tpu.memory_space<vmem>>, vector<1x128x32xf32>
    %4 = vector.shape_cast %3 : vector<1x128x32xf32> to vector<128x32xf32>
    %c1 = arith.constant 1 : index
    %c0_7 = arith.constant 0 : index
    %c0_8 = arith.constant 0 : index
    %5 = vector.load %arg2[%c1, %c0_7, %c0_8] : memref<2x128x32xf32, #tpu.memory_space<vmem>>, vector<1x128x32xf32>
    %6 = vector.shape_cast %5 : vector<1x128x32xf32> to vector<128x32xf32>
    %c0_9 = arith.constant 0 : index
    %c0_10 = arith.constant 0 : index
    %7 = vector.load %arg3[%c0_9, %c0_10] : memref<128x128xf32, #tpu.memory_space<vmem>>, vector<64x128xf32>
    %c64 = arith.constant 64 : index
    %c0_11 = arith.constant 0 : index
    %8 = vector.load %arg3[%c64, %c0_11] : memref<128x128xf32, #tpu.memory_space<vmem>>, vector<64x128xf32>
    %c0_12 = arith.constant 0 : index
    %c0_13 = arith.constant 0 : index
    %9 = vector.load %arg4[%c0_12, %c0_13] : memref<24x128xf32, #tpu.memory_space<vmem>>, vector<16x64xf32>
    %c16 = arith.constant 16 : index
    %c0_14 = arith.constant 0 : index
    %10 = vector.load %arg4[%c16, %c0_14] : memref<24x128xf32, #tpu.memory_space<vmem>>, vector<8x128xf32>
    %11 = vector.extract_strided_slice %10 {offsets = [0, 0], sizes = [1, 32], strides = [1, 1]} : vector<8x128xf32> to vector<1x32xf32>
    %12 = vector.extract_strided_slice %10 {offsets = [1, 0], sizes = [1, 32], strides = [1, 1]} : vector<8x128xf32> to vector<1x32xf32>
    %13 = vector.extract_strided_slice %10 {offsets = [2, 0], sizes = [1, 32], strides = [1, 1]} : vector<8x128xf32> to vector<1x32xf32>
    %14 = vector.extract_strided_slice %10 {offsets = [3, 0], sizes = [1, 128], strides = [1, 1]} : vector<8x128xf32> to vector<1x128xf32>
    %15 = vector.extract_strided_slice %10 {offsets = [4, 0], sizes = [1, 32], strides = [1, 1]} : vector<8x128xf32> to vector<1x32xf32>
    %16 = vector.extract_strided_slice %10 {offsets = [5, 0], sizes = [1, 32], strides = [1, 1]} : vector<8x128xf32> to vector<1x32xf32>
    %17 = vector.extract_strided_slice %10 {offsets = [6, 0], sizes = [1, 32], strides = [1, 1]} : vector<8x128xf32> to vector<1x32xf32>
    %cst = arith.constant dense<0.000000e+00> : vector<16x128xf32>
    %18 = tpu.matmul %0, %1, %cst {dimension_numbers = #tpu.dot_dimension_numbers<[1], [0], [0], [1], [0, 0, 1, 1], [], []>} : vector<16x32xf32>, vector<32x128xf32>, vector<16x128xf32> -> vector<16x128xf32>
    %c96_i32 = arith.constant 96 : i32
    %19 = tpu.dynamic_rotate %18 by %c96_i32 dim 1 : vector<16x128xf32>, i32 -> vector<16x128xf32>
    %20 = tpu.concatenate %19, %19, %19, %19 in 0 : vector<16x128xf32>, vector<16x128xf32>, vector<16x128xf32>, vector<16x128xf32> -> vector<64x128xf32>
    %21 = arith.mulf %20, %7 : vector<64x128xf32>
    %22 = arith.mulf %20, %8 : vector<64x128xf32>
    %23 = arith.addf %22, %7 : vector<64x128xf32>
    %cst_15 = arith.constant dense<0.000000e+00> : vector<16x64xf32>
    %24 = tpu.matmul %18, %21, %cst_15 {dimension_numbers = #tpu.dot_dimension_numbers<[1], [1], [0], [0], [0, 0, 1, 0], [], []>} : vector<16x128xf32>, vector<64x128xf32>, vector<16x64xf32> -> vector<16x64xf32>
    %25 = arith.addf %24, %9 : vector<16x64xf32>
    %cst_16 = arith.constant dense<0xFF800000> : vector<16xf32>
    %26 = vector.multi_reduction <maximumf>, %25, %cst_16 [1] : vector<16x64xf32> to vector<16xf32>
    %27 = vector.shape_cast %26 : vector<16xf32> to vector<16x1xf32>
    %28 = vector.broadcast %27 : vector<16x1xf32> to vector<16x64xf32>
    %29 = arith.subf %25, %28 : vector<16x64xf32>
    %30 = math.exp %29 : vector<16x64xf32>
    %cst_17 = arith.constant dense<0.000000e+00> : vector<16x128xf32>
    %31 = tpu.matmul %30, %23, %cst_17 {dimension_numbers = #tpu.dot_dimension_numbers<[1], [0], [0], [1], [0, 0, 1, 1], [], []>} : vector<16x64xf32>, vector<64x128xf32>, vector<16x128xf32> -> vector<16x128xf32>
    %cst_18 = arith.constant 1.000000e-30 : f32
    %32 = vector.broadcast %cst_18 : f32 to vector<16x128xf32>
    %33 = arith.maximumf %31, %32 : vector<16x128xf32>
    %34 = tpu.reciprocal %33 : vector<16x128xf32> -> vector<16x128xf32>
    %c32_i32 = arith.constant 32 : i32
    %35 = tpu.dynamic_rotate %34 by %c32_i32 dim 1 : vector<16x128xf32>, i32 -> vector<16x128xf32>
    %36 = arith.mulf %31, %35 : vector<16x128xf32>
    %cst_19 = arith.constant dense<0.000000e+00> : vector<16x32xf32>
    %37 = tpu.matmul %36, %4, %cst_19 {dimension_numbers = #tpu.dot_dimension_numbers<[1], [0], [0], [1], [0, 0, 1, 1], [], []>} : vector<16x128xf32>, vector<128x32xf32>, vector<16x32xf32> -> vector<16x32xf32>
    %38 = vector.broadcast %11 : vector<1x32xf32> to vector<16x32xf32>
    %39 = arith.addf %37, %38 : vector<16x32xf32>
    %cst_20 = arith.constant dense<0.000000e+00> : vector<16xf32>
    %40 = vector.multi_reduction <add>, %39, %cst_20 [1] : vector<16x32xf32> to vector<16xf32>
    %41 = vector.shape_cast %40 : vector<16xf32> to vector<16x1xf32>
    %cst_21 = arith.constant 3.200000e+01 : f32
    %42 = vector.broadcast %cst_21 : f32 to vector<16x1xf32>
    %43 = arith.divf %41, %42 : vector<16x1xf32>
    %44 = vector.broadcast %43 : vector<16x1xf32> to vector<16x32xf32>
    %45 = arith.subf %39, %44 : vector<16x32xf32>
    %46 = arith.mulf %45, %45 : vector<16x32xf32>
    %cst_22 = arith.constant dense<0.000000e+00> : vector<16xf32>
    %47 = vector.multi_reduction <add>, %46, %cst_22 [1] : vector<16x32xf32> to vector<16xf32>
    %48 = vector.shape_cast %47 : vector<16xf32> to vector<16x1xf32>
    %cst_23 = arith.constant 3.200000e+01 : f32
    %49 = vector.broadcast %cst_23 : f32 to vector<16x1xf32>
    %50 = arith.divf %48, %49 : vector<16x1xf32>
    %51 = vector.broadcast %43 : vector<16x1xf32> to vector<16x32xf32>
    %52 = arith.subf %39, %51 : vector<16x32xf32>
    %cst_24 = arith.constant 9.99999974E-6 : f32
    %53 = vector.broadcast %cst_24 : f32 to vector<16x1xf32>
    %54 = arith.addf %50, %53 : vector<16x1xf32>
    %55 = math.rsqrt %54 : vector<16x1xf32>
    %56 = vector.broadcast %55 : vector<16x1xf32> to vector<16x32xf32>
    %57 = arith.mulf %52, %56 : vector<16x32xf32>
    %58 = vector.broadcast %12 : vector<1x32xf32> to vector<16x32xf32>
    %59 = arith.mulf %57, %58 : vector<16x32xf32>
    %60 = vector.broadcast %13 : vector<1x32xf32> to vector<16x32xf32>
    %61 = arith.addf %59, %60 : vector<16x32xf32>
    %62 = arith.addf %61, %0 : vector<16x32xf32>
    %cst_25 = arith.constant 0.000000e+00 : f32
    %63 = vector.broadcast %cst_25 : f32 to vector<16x32xf32>
    %64 = arith.maximumf %62, %63 : vector<16x32xf32>
    %cst_26 = arith.constant dense<0.000000e+00> : vector<16x128xf32>
    %65 = tpu.matmul %64, %2, %cst_26 {dimension_numbers = #tpu.dot_dimension_numbers<[1], [0], [0], [1], [0, 0, 1, 1], [], []>} : vector<16x32xf32>, vector<32x128xf32>, vector<16x128xf32> -> vector<16x128xf32>
    %66 = vector.broadcast %14 : vector<1x128xf32> to vector<16x128xf32>
    %67 = arith.addf %65, %66 : vector<16x128xf32>
    %cst_27 = arith.constant 0.000000e+00 : f32
    %68 = vector.broadcast %cst_27 : f32 to vector<16x128xf32>
    %69 = arith.maximumf %67, %68 : vector<16x128xf32>
    %cst_28 = arith.constant dense<0.000000e+00> : vector<16x32xf32>
    %70 = tpu.matmul %69, %6, %cst_28 {dimension_numbers = #tpu.dot_dimension_numbers<[1], [0], [0], [1], [0, 0, 1, 1], [], []>} : vector<16x128xf32>, vector<128x32xf32>, vector<16x32xf32> -> vector<16x32xf32>
    %71 = vector.broadcast %15 : vector<1x32xf32> to vector<16x32xf32>
    %72 = arith.addf %70, %71 : vector<16x32xf32>
    %cst_29 = arith.constant dense<0.000000e+00> : vector<16xf32>
    %73 = vector.multi_reduction <add>, %72, %cst_29 [1] : vector<16x32xf32> to vector<16xf32>
    %74 = vector.shape_cast %73 : vector<16xf32> to vector<16x1xf32>
    %cst_30 = arith.constant 3.200000e+01 : f32
    %75 = vector.broadcast %cst_30 : f32 to vector<16x1xf32>
    %76 = arith.divf %74, %75 : vector<16x1xf32>
    %77 = vector.broadcast %76 : vector<16x1xf32> to vector<16x32xf32>
    %78 = arith.subf %72, %77 : vector<16x32xf32>
    %79 = arith.mulf %78, %78 : vector<16x32xf32>
    %cst_31 = arith.constant dense<0.000000e+00> : vector<16xf32>
    %80 = vector.multi_reduction <add>, %79, %cst_31 [1] : vector<16x32xf32> to vector<16xf32>
    %81 = vector.shape_cast %80 : vector<16xf32> to vector<16x1xf32>
    %cst_32 = arith.constant 3.200000e+01 : f32
    %82 = vector.broadcast %cst_32 : f32 to vector<16x1xf32>
    %83 = arith.divf %81, %82 : vector<16x1xf32>
    %84 = vector.broadcast %76 : vector<16x1xf32> to vector<16x32xf32>
    %85 = arith.subf %72, %84 : vector<16x32xf32>
    %cst_33 = arith.constant 9.99999974E-6 : f32
    %86 = vector.broadcast %cst_33 : f32 to vector<16x1xf32>
    %87 = arith.addf %83, %86 : vector<16x1xf32>
    %88 = math.rsqrt %87 : vector<16x1xf32>
    %89 = vector.broadcast %88 : vector<16x1xf32> to vector<16x32xf32>
    %90 = arith.mulf %85, %89 : vector<16x32xf32>
    %91 = vector.broadcast %16 : vector<1x32xf32> to vector<16x32xf32>
    %92 = arith.mulf %90, %91 : vector<16x32xf32>
    %93 = vector.broadcast %17 : vector<1x32xf32> to vector<16x32xf32>
    %94 = arith.addf %92, %93 : vector<16x32xf32>
    %95 = arith.addf %94, %64 : vector<16x32xf32>
    %cst_34 = arith.constant 0.000000e+00 : f32
    %96 = vector.broadcast %cst_34 : f32 to vector<16x32xf32>
    %97 = arith.maximumf %95, %96 : vector<16x32xf32>
    %c0_35 = arith.constant 0 : index
    %c0_36 = arith.constant 0 : index
    %98 = vector.load %arg5[%c0_35, %c0_36] : memref<16x32xf32, #tpu.memory_space<vmem>>, vector<16x32xf32>
    tpu.vector_store %arg5[%c0_35, %c0_36], %97 {strides = array<i32>} : memref<16x32xf32, #tpu.memory_space<vmem>>, vector<16x32xf32>,
    return
  }
}

</mosaic_0001>

<llo_original>
// kernel: tpu_custom_call.1
$region0: #{tpu_custom_call.1}
  #allocation0 [shape = 'u32[]', space=smem, size = 0x4, offset = 0x4, fixed_abs, tag = 'smem constant byte address 0x4 - core index']
  #allocation1 [shape = 'u32[144,128]{1,0:T(1,128)}', space=vmem, size = 0x12000, scoped, tag = 'internal scratch']
  %s0 = inlined_call_operand.vmem [shape: f32[16,32], index: 0, kind: input, shape index: {}]
  %s1 = inlined_call_operand.vmem [shape: f32[32,256], index: 1, kind: input, shape index: {}]
  %s2 = inlined_call_operand.vmem [shape: f32[2,128,32], index: 2, kind: input, shape index: {}]
  %s3 = inlined_call_operand.vmem [shape: f32[128,128], index: 3, kind: input, shape index: {}]
  %s4 = inlined_call_operand.vmem [shape: f32[24,128], index: 4, kind: input, shape index: {}]
  %s5 = inlined_call_operand.hbm [shape: f32[16,32], index: 5, kind: output, shape index: {}]
  %s6 = sld [smem:[#allocation0]]
  $region30: #{tpu_custom_call.1} parent=0
    _
  %s8 = ssub.s32 1, %s6
  %s9 = scalar_select 0, %s8, %s6
  $region1: #{tpu_custom_call.1} parent=0
    #allocation2 [shape = 'u8[8192]{0}', space=vmem, size = 0x2000, scoped, tag = 'output window, operand 0, single buffered']
    #allocation3 [shape = 's32[1]{0}', space=sflag, size = 0x4, scoped, tag = 'scoped memory for tpu_custom_call.1']
    %10 = vsyncpa [#allocation3], 0
    // Predicated region
    $region2: #{tpu_custom_call.1} parent=1 // pred_check
      _
    $region3: #{tpu_custom_call.1} parent=1 // pred_check_branch
      %12 = sbr.rel (0) target = $region5
    $region4: #{tpu_custom_call.1} parent=1 // pred_region
      _
    $region5: #{tpu_custom_call.1} parent=1 // pred_fallthru
      _
    // Predicated region
    $region6: #{tpu_custom_call.1} parent=1 // pred_check
      _
    $region7: #{tpu_custom_call.1} parent=1 // pred_check_branch
      %14 = sbr.rel (0) target = $region9
    $region8: #{tpu_custom_call.1} parent=1 // pred_region
      _
    $region9: #{tpu_custom_call.1} parent=1 // pred_fallthru
      _
    // Predicated region
    $region10: #{tpu_custom_call.1} parent=1 // pred_check
      _
    $region11: #{tpu_custom_call.1} parent=1 // pred_check_branch
      %16 = sbr.rel (0) target = $region13
    $region12: #{tpu_custom_call.1} parent=1 // pred_region
      _
    $region13: #{tpu_custom_call.1} parent=1 // pred_fallthru
      _
    // Predicated region
    $region14: #{tpu_custom_call.1} parent=1 // pred_check
      _
    $region15: #{tpu_custom_call.1} parent=1 // pred_check_branch
      %18 = sbr.rel (0) target = $region17
    $region16: #{tpu_custom_call.1} parent=1 // pred_region
      _
    $region17: #{tpu_custom_call.1} parent=1 // pred_fallthru
      _
    // Predicated region
    $region18: #{tpu_custom_call.1} parent=1 // pred_check
      _
    $region19: #{tpu_custom_call.1} parent=1 // pred_check_branch
      %20 = sbr.rel (0) target = $region21
    $region20: #{tpu_custom_call.1} parent=1 // pred_region
      _
    $region21: #{tpu_custom_call.1} parent=1 // pred_fallthru
      _
    %v21 = vld [vmem:[%s0] sm:$0xff]
    %v22 = vld [vmem:[%s0 + $0x8] sm:$0xff]
    %v23 = vld [vmem:[%s1] sm:$0xff]
    %v24 = vld [vmem:[%s1 + $0x10] sm:$0xff]
    %v25 = vld [vmem:[%s1 + $0x20] sm:$0xff]
    %v26 = vld [vmem:[%s1 + $0x30] sm:$0xff]
    %v27 = vld [vmem:[%s1 + $0x8] sm:$0xff]
    %v28 = vld [vmem:[%s1 + $0x18] sm:$0xff]
    %v29 = vld [vmem:[%s1 + $0x28] sm:$0xff]
    %v30 = vld [vmem:[%s1 + $0x38] sm:$0xff]
    %v31 = vld [vmem:[%s2] sm:$0xff]
    %v32 = vld [vmem:[%s2 + $0x8] sm:$0xff]
    %v33 = vld [vmem:[%s2 + $0x10] sm:$0xff]
    %v34 = vld [vmem:[%s2 + $0x18] sm:$0xff]
    %v35 = vld [vmem:[%s2 + $0x20] sm:$0xff]
    %v36 = vld [vmem:[%s2 + $0x28] sm:$0xff]
    %v37 = vld [vmem:[%s2 + $0x30] sm:$0xff]
    %v38 = vld [vmem:[%s2 + $0x38] sm:$0xff]
    %v39 = vld [vmem:[%s2 + $0x40] sm:$0xff]
    %v40 = vld [vmem:[%s2 + $0x48] sm:$0xff]
    %v41 = vld [vmem:[%s2 + $0x50] sm:$0xff]
    %v42 = vld [vmem:[%s2 + $0x58] sm:$0xff]
    %v43 = vld [vmem:[%s2 + $0x60] sm:$0xff]
    %v44 = vld [vmem:[%s2 + $0x68] sm:$0xff]
    %v45 = vld [vmem:[%s2 + $0x70] sm:$0xff]
    %v46 = vld [vmem:[%s2 + $0x78] sm:$0xff]
    %s47 = scalar_lea.vmem %s2, 128
    %v48 = vld [vmem:[%s47] sm:$0xff]
    %v49 = vld [vmem:[%s47 + $0x8] sm:$0xff]
    %v50 = vld [vmem:[%s47 + $0x10] sm:$0xff]
    %v51 = vld [vmem:[%s47 + $0x18] sm:$0xff]
    %v52 = vld [vmem:[%s47 + $0x20] sm:$0xff]
    %v53 = vld [vmem:[%s47 + $0x28] sm:$0xff]
    %v54 = vld [vmem:[%s47 + $0x30] sm:$0xff]
    %v55 = vld [vmem:[%s47 + $0x38] sm:$0xff]
    %v56 = vld [vmem:[%s47 + $0x40] sm:$0xff]
    %v57 = vld [vmem:[%s47 + $0x48] sm:$0xff]
    %v58 = vld [vmem:[%s47 + $0x50] sm:$0xff]
    %v59 = vld [vmem:[%s47 + $0x58] sm:$0xff]
    %v60 = vld [vmem:[%s47 + $0x60] sm:$0xff]
    %v61 = vld [vmem:[%s47 + $0x68] sm:$0xff]
    %v62 = vld [vmem:[%s47 + $0x70] sm:$0xff]
    %v63 = vld [vmem:[%s47 + $0x78] sm:$0xff]
    %v64 = vld [vmem:[%s3] sm:$0xff]
    %v65 = vld [vmem:[%s3 + $0x8] sm:$0xff]
    %v66 = vld [vmem:[%s3 + $0x10] sm:$0xff]
    %v67 = vld [vmem:[%s3 + $0x18] sm:$0xff]
    %v68 = vld [vmem:[%s3 + $0x20] sm:$0xff]
    %v69 = vld [vmem:[%s3 + $0x28] sm:$0xff]
    %v70 = vld [vmem:[%s3 + $0x30] sm:$0xff]
    %v71 = vld [vmem:[%s3 + $0x38] sm:$0xff]
    %v72 = vld [vmem:[%s3 + $0x40] sm:$0xff]
    %v73 = vld [vmem:[%s3 + $0x48] sm:$0xff]
    %v74 = vld [vmem:[%s3 + $0x50] sm:$0xff]
    %v75 = vld [vmem:[%s3 + $0x58] sm:$0xff]
    %v76 = vld [vmem:[%s3 + $0x60] sm:$0xff]
    %v77 = vld [vmem:[%s3 + $0x68] sm:$0xff]
    %v78 = vld [vmem:[%s3 + $0x70] sm:$0xff]
    %v79 = vld [vmem:[%s3 + $0x78] sm:$0xff]
    %v80 = vld [vmem:[%s4] sm:$0xff]
    %v81 = vld [vmem:[%s4 + $0x8] sm:$0xff]
    %v82 = vld [vmem:[%s4 + $0x10] sm:$0xff]
    %vm83 = vcmask 261120
    %v85 = vsel %vm83, %v21, 0
    %v88 = vsel %vm83, %v22, 0
    %90 = vmatprep.subr.mxu0 0.0
    %91 = vmatpush1.msra.mxu0 %v23
    %92 = vmatprep.subr.mxu0 0.0
    %93 = vmatpush1.msra.mxu0 %v24
    %94 = vmatprep.subr.mxu0 0.0
    %95 = vmatpush1.msra.mxu0 %v25
    %96 = vmatprep.subr.mxu0 0.0
    %97 = vmatpush1.msra.mxu0 %v26
    %98 = vmatprep.subr.mxu0 0.0
    %99 = vmatpush1.msra.mxu0 0.0
    %100 = vmatprep.subr.mxu0 0.0
    %101 = vmatpush1.msra.mxu0 0.0
    %102 = vmatprep.subr.mxu0 0.0
    %103 = vmatpush1.msra.mxu0 0.0
    %104 = vmatprep.subr.mxu0 0.0
    %105 = vmatpush1.msra.mxu0 0.0
    %106 = vmatprep.subr.mxu0 0.0
    %107 = vmatpush1.msra.mxu0 0.0
    %108 = vmatprep.subr.mxu0 0.0
    %109 = vmatpush1.msra.mxu0 0.0
    %110 = vmatprep.subr.mxu0 0.0
    %111 = vmatpush1.msra.mxu0 0.0
    %112 = vmatprep.subr.mxu0 0.0
    %113 = vmatpush1.msra.mxu0 0.0
    %114 = vmatprep.subr.mxu0 0.0
    %115 = vmatpush1.msra.mxu0 0.0
    %116 = vmatprep.subr.mxu0 0.0
    %117 = vmatpush1.msra.mxu0 0.0
    %118 = vmatprep.subr.mxu0 0.0
    %119 = vmatpush1.msra.mxu0 0.0
    %120 = vmatprep.subr.mxu0 0.0
    %121 = vmatpush1.msra.mxu0 0.0
    %122 = vmatprep.subr.mxu0 0.0
    %123 = vmatpush1.msra.mxu0 0.0
    %124 = vmatprep.subr.mxu0 0.0
    %125 = vmatpush1.msra.mxu0 0.0
    %126 = vmatprep.subr.mxu0 0.0
    %127 = vmatpush1.msra.mxu0 0.0
    %128 = vmatprep.subr.mxu0 0.0
    %129 = vmatpush1.msra.mxu0 0.0
    %130 = vmatprep.subr.mxu0 0.0
    %131 = vmatpush1.msra.mxu0 0.0
    %132 = vmatprep.subr.mxu0 0.0
    %133 = vmatpush1.msra.mxu0 0.0
    %134 = vmatprep.subr.mxu0 0.0
    %135 = vmatpush1.msra.mxu0 0.0
    %136 = vmatprep.subr.mxu0 0.0
    %137 = vmatpush1.msra.mxu0 0.0
    %138 = vmatprep.subr.mxu0 0.0
    %139 = vmatpush1.msra.mxu0 0.0
    %140 = vmatprep.subr.mxu0 0.0
    %141 = vmatpush1.msra.mxu0 0.0
    %142 = vmatprep.subr.mxu0 0.0
    %143 = vmatpush1.msra.mxu0 0.0
    %144 = vmatprep.subr.mxu0 0.0
    %145 = vmatpush1.msra.mxu0 0.0
    %146 = vmatprep.subr.mxu0 0.0
    %147 = vmatpush1.msra.mxu0 0.0
    %148 = vmatprep.subr.mxu0 0.0
    %149 = vmatpush1.msra.mxu0 0.0
    %150 = vmatprep.subr.mxu0 0.0
    %151 = vmatpush1.msra.mxu0 0.0
    %152 = vmatprep.subr.mxu0 0.0
    %153 = vmatpush1.msra.mxu0 0.0
    %154 = vmatprep.mubr.f32.mxu0 0.0
    %155 = vmatmul.mubr.f32.gmra.mrb[0].mxu0 %v85
    %v156 = vpop.f32.mrb[0].mxu0
    %v157 = vadd.f32 0.0, %v156
    %v158 = vpop.f32.mrb[0].mxu0
    %159 = vmatprep.mubr.f32.mxu0 0.0
    %160 = vmatmul.mubr.f32.gmra.mrb[0].mxu0 %v88
    %v161 = vpop.f32.mrb[0].mxu0
    %v162 = vadd.f32 0.0, %v161
    %v163 = vpop.f32.mrb[0].mxu0
    %164 = vdwg.mxu0
    %165 = vrot.lane.b32.xlu0 %v157, 96
    %v166 = vpop.permute.xlu0 %165
    %167 = vrot.lane.b32.xlu0 %v162, 96
    %v168 = vpop.permute.xlu0 %167
    %v169 = vmul.f32 %v166, %v64
    %v170 = vmul.f32 %v168, %v65
    %v171 = vmul.f32 %v166, %v66
    %v172 = vmul.f32 %v168, %v67
    %v173 = vmul.f32 %v166, %v68
    %v174 = vmul.f32 %v168, %v69
    %v175 = vmul.f32 %v166, %v70
    %v176 = vmul.f32 %v168, %v71
    %v177 = vmul.f32 %v166, %v72
    %v178 = vmul.f32 %v168, %v73
    %v179 = vmul.f32 %v166, %v74
    %v180 = vmul.f32 %v168, %v75
    %v181 = vmul.f32 %v166, %v76
    %v182 = vmul.f32 %v168, %v77
    %v183 = vmul.f32 %v166, %v78
    %v184 = vmul.f32 %v168, %v79
    %v185 = vadd.f32 %v177, %v64
    %v186 = vadd.f32 %v178, %v65
    %v187 = vadd.f32 %v179, %v66
    %v188 = vadd.f32 %v180, %v67
    %v189 = vadd.f32 %v181, %v68
    %v190 = vadd.f32 %v182, %v69
    %v191 = vadd.f32 %v183, %v70
    %v192 = vadd.f32 %v184, %v71
    %193 = vmatprep.subr.mxu0 0.0
    %194 = vmatpush1.xpose.msra.mxu0 %v169
    %195 = vmatprep.subr.mxu0 0.0
    %196 = vmatpush1.xpose.msra.mxu0 %v170
    %197 = vmatprep.subr.mxu0 0.0
    %198 = vmatpush1.xpose.msra.mxu0 %v171
    %199 = vmatprep.subr.mxu0 0.0
    %200 = vmatpush1.xpose.msra.mxu0 %v172
    %201 = vmatprep.subr.mxu0 0.0
    %202 = vmatpush1.xpose.msra.mxu0 %v173
    %203 = vmatprep.subr.mxu0 0.0
    %204 = vmatpush1.xpose.msra.mxu0 %v174
    %205 = vmatprep.subr.mxu0 0.0
    %206 = vmatpush1.xpose.msra.mxu0 %v175
    %207 = vmatprep.subr.mxu0 0.0
    %208 = vmatpush1.xpose.msra.mxu0 %v176
    %209 = vmatprep.subr.mxu0 0.0
    %210 = vmatpush1.xpose.msra.mxu0 0.0
    %211 = vmatprep.subr.mxu0 0.0
    %212 = vmatpush1.xpose.msra.mxu0 0.0
    %213 = vmatprep.subr.mxu0 0.0
    %214 = vmatpush1.xpose.msra.mxu0 0.0
    %215 = vmatprep.subr.mxu0 0.0
    %216 = vmatpush1.xpose.msra.mxu0 0.0
    %217 = vmatprep.subr.mxu0 0.0
    %218 = vmatpush1.xpose.msra.mxu0 0.0
    %219 = vmatprep.subr.mxu0 0.0
    %220 = vmatpush1.xpose.msra.mxu0 0.0
    %221 = vmatprep.subr.mxu0 0.0
    %222 = vmatpush1.xpose.msra.mxu0 0.0
    %223 = vmatprep.subr.mxu0 0.0
    %224 = vmatpush1.xpose.msra.mxu0 0.0
    %225 = vmatprep.subr.mxu0 0.0
    %226 = vmatpush1.xpose.msra.mxu0 0.0
    %227 = vmatprep.subr.mxu0 0.0
    %228 = vmatpush1.xpose.msra.mxu0 0.0
    %229 = vmatprep.subr.mxu0 0.0
    %230 = vmatpush1.xpose.msra.mxu0 0.0
    %231 = vmatprep.subr.mxu0 0.0
    %232 = vmatpush1.xpose.msra.mxu0 0.0
    %233 = vmatprep.subr.mxu0 0.0
    %234 = vmatpush1.xpose.msra.mxu0 0.0
    %235 = vmatprep.subr.mxu0 0.0
    %236 = vmatpush1.xpose.msra.mxu0 0.0
    %237 = vmatprep.subr.mxu0 0.0
    %238 = vmatpush1.xpose.msra.mxu0 0.0
    %239 = vmatprep.subr.mxu0 0.0
    %240 = vmatpush1.xpose.msra.mxu0 0.0
    %241 = vmatprep.subr.mxu0 0.0
    %242 = vmatpush1.xpose.msra.mxu0 0.0
    %243 = vmatprep.subr.mxu0 0.0
    %244 = vmatpush1.xpose.msra.mxu0 0.0
    %245 = vmatprep.subr.mxu0 0.0
    %246 = vmatpush1.xpose.msra.mxu0 0.0
    %247 = vmatprep.subr.mxu0 0.0
    %248 = vmatpush1.xpose.msra.mxu0 0.0
    %249 = vmatprep.subr.mxu0 0.0
    %250 = vmatpush1.xpose.msra.mxu0 0.0
    %251 = vmatprep.subr.mxu0 0.0
    %252 = vmatpush1.xpose.msra.mxu0 0.0
    %253 = vmatprep.subr.mxu0 0.0
    %254 = vmatpush1.xpose.msra.mxu0 0.0
    %255 = vmatprep.subr.mxu0 0.0
    %256 = vmatpush1.xpose.msra.mxu0 0.0
    %257 = vmatprep.mubr.f32.mxu0 0.0
    %258 = vmatmul.mubr.f32.gmra.mrb[0].mxu0 %v157
    %v259 = vpop.f32.mrb[0].mxu0
    %v260 = vadd.f32 %v80, %v259
    %v261 = vpop.f32.mrb[0].mxu0
    %262 = vmatprep.mubr.f32.mxu0 0.0
    %263 = vmatmul.mubr.f32.gmra.mrb[0].mxu0 %v162
    %v264 = vpop.f32.mrb[0].mxu0
    %v265 = vadd.f32 %v81, %v264
    %v266 = vpop.f32.mrb[0].mxu0
    %267 = vdwg.mxu0
    %vm268 = vcmask 523264
    %v269 = vsel %vm268, %v260, -inf
    %270 = vmax.xlane.f32.xlu0 %v269
    %v271 = vpop.xlane.xlu0 %270
    %v272 = vsel %vm268, %v265, -inf
    %273 = vmax.xlane.f32.xlu0 %v272
    %v274 = vpop.xlane.xlu0 %273
    %v275 = vsub.f32 %v260, %v271
    %v276 = vsub.f32 %v265, %v274
    %v277 = vmul.f32 %v275, 1.442695
    %v278 = vpow.pop %v277
    %v279 = vmul.f32 %v276, 1.442695
    %v280 = vpow.pop %v279
    %v282 = vsel %vm268, %v278, 0
    %v285 = vsel %vm268, %v280, 0
    %287 = vmatprep.subr.mxu0 0.0
    %288 = vmatpush1.msra.mxu0 %v185
    %289 = vmatprep.subr.mxu0 0.0
    %290 = vmatpush1.msra.mxu0 %v186
    %291 = vmatprep.subr.mxu0 0.0
    %292 = vmatpush1.msra.mxu0 %v187
    %293 = vmatprep.subr.mxu0 0.0
    %294 = vmatpush1.msra.mxu0 %v188
    %295 = vmatprep.subr.mxu0 0.0
    %296 = vmatpush1.msra.mxu0 %v189
    %297 = vmatprep.subr.mxu0 0.0
    %298 = vmatpush1.msra.mxu0 %v190
    %299 = vmatprep.subr.mxu0 0.0
    %300 = vmatpush1.msra.mxu0 %v191
    %301 = vmatprep.subr.mxu0 0.0
    %302 = vmatpush1.msra.mxu0 %v192
    %303 = vmatprep.subr.mxu0 0.0
    %304 = vmatpush1.msra.mxu0 0.0
    %305 = vmatprep.subr.mxu0 0.0
    %306 = vmatpush1.msra.mxu0 0.0
    %307 = vmatprep.subr.mxu0 0.0
    %308 = vmatpush1.msra.mxu0 0.0
    %309 = vmatprep.subr.mxu0 0.0
    %310 = vmatpush1.msra.mxu0 0.0
    %311 = vmatprep.subr.mxu0 0.0
    %312 = vmatpush1.msra.mxu0 0.0
    %313 = vmatprep.subr.mxu0 0.0
    %314 = vmatpush1.msra.mxu0 0.0
    %315 = vmatprep.subr.mxu0 0.0
    %316 = vmatpush1.msra.mxu0 0.0
    %317 = vmatprep.subr.mxu0 0.0
    %318 = vmatpush1.msra.mxu0 0.0
    %319 = vmatprep.subr.mxu0 0.0
    %320 = vmatpush1.msra.mxu0 0.0
    %321 = vmatprep.subr.mxu0 0.0
    %322 = vmatpush1.msra.mxu0 0.0
    %323 = vmatprep.subr.mxu0 0.0
    %324 = vmatpush1.msra.mxu0 0.0
    %325 = vmatprep.subr.mxu0 0.0
    %326 = vmatpush1.msra.mxu0 0.0
    %327 = vmatprep.subr.mxu0 0.0
    %328 = vmatpush1.msra.mxu0 0.0
    %329 = vmatprep.subr.mxu0 0.0
    %330 = vmatpush1.msra.mxu0 0.0
    %331 = vmatprep.subr.mxu0 0.0
    %332 = vmatpush1.msra.mxu0 0.0
    %333 = vmatprep.subr.mxu0 0.0
    %334 = vmatpush1.msra.mxu0 0.0
    %335 = vmatprep.subr.mxu0 0.0
    %336 = vmatpush1.msra.mxu0 0.0
    %337 = vmatprep.subr.mxu0 0.0
    %338 = vmatpush1.msra.mxu0 0.0
    %339 = vmatprep.subr.mxu0 0.0
    %340 = vmatpush1.msra.mxu0 0.0
    %341 = vmatprep.subr.mxu0 0.0
    %342 = vmatpush1.msra.mxu0 0.0
    %343 = vmatprep.subr.mxu0 0.0
    %344 = vmatpush1.msra.mxu0 0.0
    %345 = vmatprep.subr.mxu0 0.0
    %346 = vmatpush1.msra.mxu0 0.0
    %347 = vmatprep.subr.mxu0 0.0
    %348 = vmatpush1.msra.mxu0 0.0
    %349 = vmatprep.subr.mxu0 0.0
    %350 = vmatpush1.msra.mxu0 0.0
    %351 = vmatprep.mubr.f32.mxu0 0.0
    %352 = vmatmul.mubr.f32.gmra.mrb[0].mxu0 %v282
    %v353 = vpop.f32.mrb[0].mxu0
    %v354 = vadd.f32 0.0, %v353
    %v355 = vpop.f32.mrb[0].mxu0
    %356 = vmatprep.mubr.f32.mxu0 0.0
    %357 = vmatmul.mubr.f32.gmra.mrb[0].mxu0 %v285
    %v358 = vpop.f32.mrb[0].mxu0
    %v359 = vadd.f32 0.0, %v358
    %v360 = vpop.f32.mrb[0].mxu0
    %361 = vdwg.mxu0
    %v362 = vmax.f32 %v354, 1e-30
    %v363 = vmax.f32 %v359, 1e-30
    %v364 = vrcp.pop %v362
    %v365 = vrcp.pop %v363
    %366 = vrot.lane.b32.xlu0 %v364, 32
    %v367 = vpop.permute.xlu0 %366
    %368 = vrot.lane.b32.xlu0 %v365, 32
    %v369 = vpop.permute.xlu0 %368
    %v370 = vmul.f32 %v354, %v367
    %v371 = vmul.f32 %v359, %v369
    %v372 = vlaneseq
    %v373 = vshrl.u32 %v372, 7
    %v374 = vsub.s32 0, %v373
    %v375 = vrot.slane %v82, %v374
    %376 = vmatprep.subr.mxu0 0.0
    %377 = vmatpush1.msra.mxu0 %v31
    %378 = vmatprep.subr.mxu0 0.0
    %379 = vmatpush1.msra.mxu0 %v32
    %380 = vmatprep.subr.mxu0 0.0
    %381 = vmatpush1.msra.mxu0 %v33
    %382 = vmatprep.subr.mxu0 0.0
    %383 = vmatpush1.msra.mxu0 %v34
    %384 = vmatprep.subr.mxu0 0.0
    %385 = vmatpush1.msra.mxu0 %v35
    %386 = vmatprep.subr.mxu0 0.0
    %387 = vmatpush1.msra.mxu0 %v36
    %388 = vmatprep.subr.mxu0 0.0
    %389 = vmatpush1.msra.mxu0 %v37
    %390 = vmatprep.subr.mxu0 0.0
    %391 = vmatpush1.msra.mxu0 %v38
    %392 = vmatprep.subr.mxu0 0.0
    %393 = vmatpush1.msra.mxu0 %v39
    %394 = vmatprep.subr.mxu0 0.0
    %395 = vmatpush1.msra.mxu0 %v40
    %396 = vmatprep.subr.mxu0 0.0
    %397 = vmatpush1.msra.mxu0 %v41
    %398 = vmatprep.subr.mxu0 0.0
    %399 = vmatpush1.msra.mxu0 %v42
    %400 = vmatprep.subr.mxu0 0.0
    %401 = vmatpush1.msra.mxu0 %v43
    %402 = vmatprep.subr.mxu0 0.0
    %403 = vmatpush1.msra.mxu0 %v44
    %404 = vmatprep.subr.mxu0 0.0
    %405 = vmatpush1.msra.mxu0 %v45
    %406 = vmatprep.subr.mxu0 0.0
    %407 = vmatpush1.msra.mxu0 %v46
    %408 = vmatprep.subr.mxu0 0.0
    %409 = vmatpush1.msra.mxu0 0.0
    %410 = vmatprep.subr.mxu0 0.0
    %411 = vmatpush1.msra.mxu0 0.0
    %412 = vmatprep.subr.mxu0 0.0
    %413 = vmatpush1.msra.mxu0 0.0
    %414 = vmatprep.subr.mxu0 0.0
    %415 = vmatpush1.msra.mxu0 0.0
    %416 = vmatprep.subr.mxu0 0.0
    %417 = vmatpush1.msra.mxu0 0.0
    %418 = vmatprep.subr.mxu0 0.0
    %419 = vmatpush1.msra.mxu0 0.0
    %420 = vmatprep.subr.mxu0 0.0
    %421 = vmatpush1.msra.mxu0 0.0
    %422 = vmatprep.subr.mxu0 0.0
    %423 = vmatpush1.msra.mxu0 0.0
    %424 = vmatprep.subr.mxu0 0.0
    %425 = vmatpush1.msra.mxu0 0.0
    %426 = vmatprep.subr.mxu0 0.0
    %427 = vmatpush1.msra.mxu0 0.0
    %428 = vmatprep.subr.mxu0 0.0
    %429 = vmatpush1.msra.mxu0 0.0
    %430 = vmatprep.subr.mxu0 0.0
    %431 = vmatpush1.msra.mxu0 0.0
    %432 = vmatprep.subr.mxu0 0.0
    %433 = vmatpush1.msra.mxu0 0.0
    %434 = vmatprep.subr.mxu0 0.0
    %435 = vmatpush1.msra.mxu0 0.0
    %436 = vmatprep.subr.mxu0 0.0
    %437 = vmatpush1.msra.mxu0 0.0
    %438 = vmatprep.subr.mxu0 0.0
    %439 = vmatpush1.msra.mxu0 0.0
    %440 = vmatprep.mubr.f32.mxu0 0.0
    %441 = vmatmul.mubr.f32.gmra.mrb[0].mxu0 %v370
    %v442 = vpop.f32.mrb[0].mxu0
    %v443 = vadd.f32 %v375, %v442
    %v444 = vpop.f32.mrb[0].mxu0
    %445 = vmatprep.mubr.f32.mxu0 0.0
    %446 = vmatmul.mubr.f32.gmra.mrb[0].mxu0 %v371
    %v447 = vpop.f32.mrb[0].mxu0
    %v448 = vadd.f32 %v375, %v447
    %v449 = vpop.f32.mrb[0].mxu0
    %450 = vdwg.mxu0
    %v451 = vsel %vm83, %v443, 0.0
    %452 = vadd.xlane.f32.xlu0 %v451
    %v453 = vpop.xlane.xlu0 %452
    %v454 = vsel %vm83, %v448, 0.0
    %455 = vadd.xlane.f32.xlu0 %v454
    %v456 = vpop.xlane.xlu0 %455
    %v457 = vrcp.pop 32.0
    %v458 = vmul.f32 %v453, %v457
    %v459 = vmul.f32 %v456, %v457
    %v460 = vsub.f32 %v443, %v458
    %v461 = vsub.f32 %v448, %v459
    %v462 = vmul.f32 %v460, %v460
    %v463 = vmul.f32 %v461, %v461
    %v464 = vsel %vm83, %v462, 0.0
    %465 = vadd.xlane.f32.xlu0 %v464
    %v466 = vpop.xlane.xlu0 %465
    %v467 = vsel %vm83, %v463, 0.0
    %468 = vadd.xlane.f32.xlu0 %v467
    %v469 = vpop.xlane.xlu0 %468
    %v470 = vmul.f32 %v466, %v457
    %v471 = vmul.f32 %v469, %v457
    %v472 = vadd.f32 %v470, 1e-05
    %v473 = vadd.f32 %v471, 1e-05
    %v474 = vrsqrt.pop %v472
    %v475 = vrsqrt.pop %v473
    %v476 = vmul.f32 %v460, %v474
    %v477 = vmul.f32 %v461, %v475
    %v478 = vlaneseq
    %v479 = vshrl.u32 %v478, 7
    %v480 = vsub.s32 1, %v479
    %v481 = vrot.slane %v82, %v480
    %v482 = vmul.f32 %v476, %v481
    %v483 = vmul.f32 %v477, %v481
    %v484 = vlaneseq
    %v485 = vshrl.u32 %v484, 7
    %v486 = vsub.s32 2, %v485
    %v487 = vrot.slane %v82, %v486
    %v488 = vadd.f32 %v482, %v487
    %v489 = vadd.f32 %v483, %v487
    %v490 = vadd.f32 %v488, %v21
    %v491 = vadd.f32 %v489, %v22
    %v492 = vmax.f32 %v490, 0.0
    %v493 = vmax.f32 %v491, 0.0
    %v494 = vlaneseq
    %v495 = vshrl.u32 %v494, 7
    %v496 = vsub.s32 3, %v495
    %v497 = vrot.slane %v82, %v496
    %v499 = vsel %vm83, %v492, 0
    %v502 = vsel %vm83, %v493, 0
    %504 = vmatprep.subr.mxu0 0.0
    %505 = vmatpush1.msra.mxu0 %v27
    %506 = vmatprep.subr.mxu0 0.0
    %507 = vmatpush1.msra.mxu0 %v28
    %508 = vmatprep.subr.mxu0 0.0
    %509 = vmatpush1.msra.mxu0 %v29
    %510 = vmatprep.subr.mxu0 0.0
    %511 = vmatpush1.msra.mxu0 %v30
    %512 = vmatprep.subr.mxu0 0.0
    %513 = vmatpush1.msra.mxu0 0.0
    %514 = vmatprep.subr.mxu0 0.0
    %515 = vmatpush1.msra.mxu0 0.0
    %516 = vmatprep.subr.mxu0 0.0
    %517 = vmatpush1.msra.mxu0 0.0
    %518 = vmatprep.subr.mxu0 0.0
    %519 = vmatpush1.msra.mxu0 0.0
    %520 = vmatprep.subr.mxu0 0.0
    %521 = vmatpush1.msra.mxu0 0.0
    %522 = vmatprep.subr.mxu0 0.0
    %523 = vmatpush1.msra.mxu0 0.0
    %524 = vmatprep.subr.mxu0 0.0
    %525 = vmatpush1.msra.mxu0 0.0
    %526 = vmatprep.subr.mxu0 0.0
    %527 = vmatpush1.msra.mxu0 0.0
    %528 = vmatprep.subr.mxu0 0.0
    %529 = vmatpush1.msra.mxu0 0.0
    %530 = vmatprep.subr.mxu0 0.0
    %531 = vmatpush1.msra.mxu0 0.0
    %532 = vmatprep.subr.mxu0 0.0
    %533 = vmatpush1.msra.mxu0 0.0
    %534 = vmatprep.subr.mxu0 0.0
    %535 = vmatpush1.msra.mxu0 0.0
    %536 = vmatprep.subr.mxu0 0.0
    %537 = vmatpush1.msra.mxu0 0.0
    %538 = vmatprep.subr.mxu0 0.0
    %539 = vmatpush1.msra.mxu0 0.0
    %540 = vmatprep.subr.mxu0 0.0
    %541 = vmatpush1.msra.mxu0 0.0
    %542 = vmatprep.subr.mxu0 0.0
    %543 = vmatpush1.msra.mxu0 0.0
    %544 = vmatprep.subr.mxu0 0.0
    %545 = vmatpush1.msra.mxu0 0.0
    %546 = vmatprep.subr.mxu0 0.0
    %547 = vmatpush1.msra.mxu0 0.0
    %548 = vmatprep.subr.mxu0 0.0
    %549 = vmatpush1.msra.mxu0 0.0
    %550 = vmatprep.subr.mxu0 0.0
    %551 = vmatpush1.msra.mxu0 0.0
    %552 = vmatprep.subr.mxu0 0.0
    %553 = vmatpush1.msra.mxu0 0.0
    %554 = vmatprep.subr.mxu0 0.0
    %555 = vmatpush1.msra.mxu0 0.0
    %556 = vmatprep.subr.mxu0 0.0
    %557 = vmatpush1.msra.mxu0 0.0
    %558 = vmatprep.subr.mxu0 0.0
    %559 = vmatpush1.msra.mxu0 0.0
    %560 = vmatprep.subr.mxu0 0.0
    %561 = vmatpush1.msra.mxu0 0.0
    %562 = vmatprep.subr.mxu0 0.0
    %563 = vmatpush1.msra.mxu0 0.0
    %564 = vmatprep.subr.mxu0 0.0
    %565 = vmatpush1.msra.mxu0 0.0
    %566 = vmatprep.subr.mxu0 0.0
    %567 = vmatpush1.msra.mxu0 0.0
    %568 = vmatprep.mubr.f32.mxu0 0.0
    %569 = vmatmul.mubr.f32.gmra.mrb[0].mxu0 %v499
    %v570 = vpop.f32.mrb[0].mxu0
    %v571 = vadd.f32 %v497, %v570
    %v572 = vpop.f32.mrb[0].mxu0
    %573 = vmatprep.mubr.f32.mxu0 0.0
    %574 = vmatmul.mubr.f32.gmra.mrb[0].mxu0 %v502
    %v575 = vpop.f32.mrb[0].mxu0
    %v576 = vadd.f32 %v497, %v575
    %v577 = vpop.f32.mrb[0].mxu0
    %578 = vdwg.mxu0
    %v579 = vmax.f32 %v571, 0.0
    %v580 = vmax.f32 %v576, 0.0
    %v581 = vlaneseq
    %v582 = vshrl.u32 %v581, 7
    %v583 = vsub.s32 4, %v582
    %v584 = vrot.slane %v82, %v583
    %585 = vmatprep.subr.mxu0 0.0
    %586 = vmatpush1.msra.mxu0 %v48
    %587 = vmatprep.subr.mxu0 0.0
    %588 = vmatpush1.msra.mxu0 %v49
    %589 = vmatprep.subr.mxu0 0.0
    %590 = vmatpush1.msra.mxu0 %v50
    %591 = vmatprep.subr.mxu0 0.0
    %592 = vmatpush1.msra.mxu0 %v51
    %593 = vmatprep.subr.mxu0 0.0
    %594 = vmatpush1.msra.mxu0 %v52
    %595 = vmatprep.subr.mxu0 0.0
    %596 = vmatpush1.msra.mxu0 %v53
    %597 = vmatprep.subr.mxu0 0.0
    %598 = vmatpush1.msra.mxu0 %v54
    %599 = vmatprep.subr.mxu0 0.0
    %600 = vmatpush1.msra.mxu0 %v55
    %601 = vmatprep.subr.mxu0 0.0
    %602 = vmatpush1.msra.mxu0 %v56
    %603 = vmatprep.subr.mxu0 0.0
    %604 = vmatpush1.msra.mxu0 %v57
    %605 = vmatprep.subr.mxu0 0.0
    %606 = vmatpush1.msra.mxu0 %v58
    %607 = vmatprep.subr.mxu0 0.0
    %608 = vmatpush1.msra.mxu0 %v59
    %609 = vmatprep.subr.mxu0 0.0
    %610 = vmatpush1.msra.mxu0 %v60
    %611 = vmatprep.subr.mxu0 0.0
    %612 = vmatpush1.msra.mxu0 %v61
    %613 = vmatprep.subr.mxu0 0.0
    %614 = vmatpush1.msra.mxu0 %v62
    %615 = vmatprep.subr.mxu0 0.0
    %616 = vmatpush1.msra.mxu0 %v63
    %617 = vmatprep.subr.mxu0 0.0
    %618 = vmatpush1.msra.mxu0 0.0
    %619 = vmatprep.subr.mxu0 0.0
    %620 = vmatpush1.msra.mxu0 0.0
    %621 = vmatprep.subr.mxu0 0.0
    %622 = vmatpush1.msra.mxu0 0.0
    %623 = vmatprep.subr.mxu0 0.0
    %624 = vmatpush1.msra.mxu0 0.0
    %625 = vmatprep.subr.mxu0 0.0
    %626 = vmatpush1.msra.mxu0 0.0
    %627 = vmatprep.subr.mxu0 0.0
    %628 = vmatpush1.msra.mxu0 0.0
    %629 = vmatprep.subr.mxu0 0.0
    %630 = vmatpush1.msra.mxu0 0.0
    %631 = vmatprep.subr.mxu0 0.0
    %632 = vmatpush1.msra.mxu0 0.0
    %633 = vmatprep.subr.mxu0 0.0
    %634 = vmatpush1.msra.mxu0 0.0
    %635 = vmatprep.subr.mxu0 0.0
    %636 = vmatpush1.msra.mxu0 0.0
    %637 = vmatprep.subr.mxu0 0.0
    %638 = vmatpush1.msra.mxu0 0.0
    %639 = vmatprep.subr.mxu0 0.0
    %640 = vmatpush1.msra.mxu0 0.0
    %641 = vmatprep.subr.mxu0 0.0
    %642 = vmatpush1.msra.mxu0 0.0
    %643 = vmatprep.subr.mxu0 0.0
    %644 = vmatpush1.msra.mxu0 0.0
    %645 = vmatprep.subr.mxu0 0.0
    %646 = vmatpush1.msra.mxu0 0.0
    %647 = vmatprep.subr.mxu0 0.0
    %648 = vmatpush1.msra.mxu0 0.0
    %649 = vmatprep.mubr.f32.mxu0 0.0
    %650 = vmatmul.mubr.f32.gmra.mrb[0].mxu0 %v579
    %v651 = vpop.f32.mrb[0].mxu0
    %v652 = vadd.f32 %v584, %v651
    %v653 = vpop.f32.mrb[0].mxu0
    %654 = vmatprep.mubr.f32.mxu0 0.0
    %655 = vmatmul.mubr.f32.gmra.mrb[0].mxu0 %v580
    %v656 = vpop.f32.mrb[0].mxu0
    %v657 = vadd.f32 %v584, %v656
    %v658 = vpop.f32.mrb[0].mxu0
    %659 = vdwg.mxu0
    %v660 = vsel %vm83, %v652, 0.0
    %661 = vadd.xlane.f32.xlu0 %v660
    %v662 = vpop.xlane.xlu0 %661
    %v663 = vsel %vm83, %v657, 0.0
    %664 = vadd.xlane.f32.xlu0 %v663
    %v665 = vpop.xlane.xlu0 %664
    %v666 = vmul.f32 %v662, %v457
    %v667 = vmul.f32 %v665, %v457
    %v668 = vsub.f32 %v652, %v666
    %v669 = vsub.f32 %v657, %v667
    %v670 = vmul.f32 %v668, %v668
    %v671 = vmul.f32 %v669, %v669
    %v672 = vsel %vm83, %v670, 0.0
    %673 = vadd.xlane.f32.xlu0 %v672
    %v674 = vpop.xlane.xlu0 %673
    %v675 = vsel %vm83, %v671, 0.0
    %676 = vadd.xlane.f32.xlu0 %v675
    %v677 = vpop.xlane.xlu0 %676
    %v678 = vmul.f32 %v674, %v457
    %v679 = vmul.f32 %v677, %v457
    %v680 = vadd.f32 %v678, 1e-05
    %v681 = vadd.f32 %v679, 1e-05
    %v682 = vrsqrt.pop %v680
    %v683 = vrsqrt.pop %v681
    %v684 = vmul.f32 %v668, %v682
    %v685 = vmul.f32 %v669, %v683
    %v686 = vlaneseq
    %v687 = vshrl.u32 %v686, 7
    %v688 = vsub.s32 5, %v687
    %v689 = vrot.slane %v82, %v688
    %v690 = vmul.f32 %v684, %v689
    %v691 = vmul.f32 %v685, %v689
    %v692 = vlaneseq
    %v693 = vshrl.u32 %v692, 7
    %v694 = vsub.s32 6, %v693
    %v695 = vrot.slane %v82, %v694
    %v696 = vadd.f32 %v690, %v695
    %v697 = vadd.f32 %v691, %v695
    %v698 = vadd.f32 %v696, %v492
    %v699 = vadd.f32 %v697, %v493
    %v700 = vmax.f32 %v698, 0.0
    %v701 = vmax.f32 %v699, 0.0
    %702 = vst.msk [vmem:[#allocation2] sm:$0xff] %vm83, %v700
    %703 = vst.msk [vmem:[#allocation2 + $0x8] sm:$0xff] %vm83, %v701
    // Predicated region
    $region22: #{tpu_custom_call.1} parent=1 // pred_check
      _
    $region23: #{tpu_custom_call.1} parent=1 // pred_check_branch
      %705 = sbr.rel (0) target = $region25
    $region24: #{tpu_custom_call.1} parent=1 // pred_region
      %s707 = ssub.s32 256, 256
      %708 = vsyncadd [#allocation3], %s707
      %s709 = sshll.u32 [#allocation2], 4
      %s710 = int_to_ptr.vmem [resolvable:$true] %s709
      %715 = dma.vmem_to_hbm [thread:$0]  %s710, 256, %s5, [#allocation3], 128, 128, 8
    $region25: #{tpu_custom_call.1} parent=1 // pred_fallthru
      _
    // Predicated region
    $region26: #{tpu_custom_call.1} parent=1 // pred_check
      _
    $region27: #{tpu_custom_call.1} parent=1 // pred_check_branch
      %717 = sbr.rel (0) target = $region29
    $region28: #{tpu_custom_call.1} parent=1 // pred_region
      %718 = dma.done [#allocation3], 256
    $region29: #{tpu_custom_call.1} parent=1 // pred_fallthru
      _
    %719 = vsyncpa [#allocation3], 1

</llo_original>
